<compile_context>
chip_gen: v5e
topology: v5e:2x2
jax: 0.10.0
libtpu: 0.0.40
codegen_flags: <defaults>
</compile_context>

<pallas_src>
import functools

import jax
import jax.numpy as jnp
from jax.experimental import pallas as pl
from jax.experimental.pallas import tpu as pltpu


def _round_up(v, m):
    return (v + m - 1) // m * m


def _mlp_kernel(*refs, num_mid):
    """Whole-MLP fused kernel for one batch tile.

    Ref order:
      alpha (1,1) SMEM, x (TB,D_in),
      w_first (D_in,D_h), b_first (1,D_h),
      [w_mid (num_mid,D_h,D_h), b_mid (num_mid,1,D_h)]   # only if num_mid > 0
      w_last (D_h,D_out), b_last (1,D_out),
      o (TB,D_out)
    Weights may be bf16 (MXU operands); accumulation / elementwise math is f32.
    """
    alpha_ref, x_ref, wf_ref, bf_ref = refs[:4]
    if num_mid > 0:
        wm_ref, bm_ref, wl_ref, bl_ref, o_ref = refs[4:9]
    else:
        wl_ref, bl_ref, o_ref = refs[4:7]

    a = alpha_ref[0, 0]
    mm_dtype = wf_ref.dtype

    def linear(h, w, b):
        return jnp.dot(h.astype(mm_dtype), w,
                       preferred_element_type=jnp.float32) + b

    def prelu(y):
        return jnp.where(y >= 0.0, y, a * y)

    h = prelu(linear(x_ref[...], wf_ref[...], bf_ref[...]))
    for l in range(num_mid):                 # static unroll; stays on-chip
        h = prelu(linear(h, wm_ref[l], bm_ref[l]))
        # Dropout is identity in eval mode; bn=False -> no BatchNorm.
    o_ref[...] = linear(h, wl_ref[...], bl_ref[...]).astype(o_ref.dtype)


def prepare_mlp_params(params, alpha, *, matmul_dtype=jnp.float32):
    """One-time packing: pad each boundary dim to a multiple of 128 and cast
    weights to the MXU-operand dtype.  Call ONCE, reuse for every forward."""
    num_layers = len(params)
    if num_layers < 2:
        raise ValueError("MLP must have at least two layers!")
    feat_dim = params[0][0].shape[0]
    out_dim = params[-1][0].shape[1]
    hidden_dim = params[0][0].shape[1]

    d_in = _round_up(feat_dim, 128)
    d_h = _round_up(hidden_dim, 128)
    d_out = _round_up(out_dim, 128)

    def pad_w(w, rows, cols):
        return jnp.pad(w, ((0, rows - w.shape[0]),
                           (0, cols - w.shape[1]))).astype(matmul_dtype)

    def pad_b(b, cols):
        return jnp.pad(b, ((0, 0), (0, cols - b.shape[1]))).astype(jnp.float32)

    w_first = pad_w(params[0][0], d_in, d_h)
    b_first = pad_b(params[0][1], d_h)
    w_last = pad_w(params[-1][0], d_h, d_out)
    b_last = pad_b(params[-1][1], d_out)
    if num_layers > 2:
        w_mid = jnp.stack([pad_w(w, d_h, d_h) for (w, _) in params[1:-1]])
        b_mid = jnp.stack([pad_b(b, d_h) for (_, b) in params[1:-1]])
    else:
        w_mid, b_mid = None, None

    return dict(
        alpha=jnp.asarray(alpha, jnp.float32).reshape(1, 1),
        w_first=w_first, b_first=b_first,
        w_mid=w_mid, b_mid=b_mid,
        w_last=w_last, b_last=b_last,
        feat_dim=feat_dim, out_dim=out_dim,
    )


def mlp_forward(x, prepared, *, batch_tile=512):
    """Fused MLP forward: one pallas_call, batch-tiled grid, weights resident."""
    batch, feat_dim = x.shape
    if feat_dim != prepared["feat_dim"]:
        raise ValueError("input feature dim does not match prepared params")

    alpha = prepared["alpha"]
    wf, bf = prepared["w_first"], prepared["b_first"]
    wm, bm = prepared["w_mid"], prepared["b_mid"]
    wl, bl = prepared["w_last"], prepared["b_last"]
    out_dim = prepared["out_dim"]

    d_in, d_h = wf.shape
    d_out = wl.shape[1]
    num_mid = 0 if wm is None else wm.shape[0]

    # Batch tiling: minimize padding waste; give v7x's 2 TCs >= 2 tiles.
    n_tiles = pl.cdiv(batch, batch_tile)
    if batch >= 16:
        n_tiles = max(2, n_tiles)
    tb = _round_up(pl.cdiv(batch, n_tiles), 8)
    batch_pad = _round_up(batch, tb)
    grid = (batch_pad // tb,)

    # Pad input only up to (batch_pad, d_in); fuses with the call under jit.
    if batch_pad != batch or d_in != feat_dim:
        x_in = jnp.pad(x, ((0, batch_pad - batch), (0, d_in - feat_dim)))
    else:
        x_in = x

    # VMEM budget: single-buffered weights/biases + double-buffered I/O tiles.
    itemsize = x.dtype.itemsize
    weight_bytes = (wf.size * wf.dtype.itemsize + wl.size * wl.dtype.itemsize
                    + (0 if wm is None else wm.size * wm.dtype.itemsize))
    bias_bytes = 4 * (bf.size + bl.size + (0 if bm is None else bm.size))
    tile_bytes = 2 * tb * d_in * itemsize + 2 * tb * d_out * itemsize
    act_bytes = 4 * tb * max(d_in, d_h, d_out) * 4      # f32 temporaries
    working = weight_bytes + bias_bytes + tile_bytes + act_bytes
    vmem_limit = int(min(100 * 2**20, max(32 * 2**20, 2 * working + (4 << 20))))

    resident = functools.partial(pl.BlockSpec, pipeline_mode=pl.Buffered(1))
    in_specs = [
        pl.BlockSpec(memory_space=pltpu.MemorySpace.SMEM),      # alpha (1,1)
        pl.BlockSpec((tb, d_in), lambda i: (i, 0)),             # x batch tile
        resident((d_in, d_h), lambda i: (0, 0)),                # first weight
        resident((1, d_h), lambda i: (0, 0)),                   # first bias
    ]
    args = [alpha, x_in, wf, bf]
    if num_mid > 0:
        in_specs += [
            resident((num_mid, d_h, d_h), lambda i: (0, 0, 0)),  # mid weights
            resident((num_mid, 1, d_h), lambda i: (0, 0, 0)),    # mid biases
        ]
        args += [wm, bm]
    in_specs += [
        resident((d_h, d_out), lambda i: (0, 0)),               # last weight
        resident((1, d_out), lambda i: (0, 0)),                  # last bias
    ]
    args += [wl, bl]

    flops = 2 * batch_pad * (d_in * d_h + num_mid * d_h * d_h + d_h * d_out)
    bytes_accessed = (x_in.size * itemsize + weight_bytes + bias_bytes
                      + batch_pad * d_out * itemsize)

    out_pad = pl.pallas_call(
        functools.partial(_mlp_kernel, num_mid=num_mid),
        out_shape=jax.ShapeDtypeStruct((batch_pad, d_out), x.dtype),
        grid=grid,
        in_specs=in_specs,
        out_specs=pl.BlockSpec((tb, d_out), lambda i: (i, 0)),
        compiler_params=pltpu.CompilerParams(
            dimension_semantics=("parallel",),
            vmem_limit_bytes=vmem_limit,
        ),
        cost_estimate=pl.CostEstimate(
            flops=flops, transcendentals=0, bytes_accessed=bytes_accessed),
    )(*args)

    return out_pad[:batch, :out_dim]


def init_mlp_params(key, feat_dim, hidden_dim, num_layers, output_dim):
    """Xavier-uniform weights (gain = sqrt(2) == calculate_gain('relu')),
    zero biases, PReLU alpha = 0.25 -- matching reset_parameters()."""
    if num_layers < 2:
        raise ValueError("MLP must have at least two layers!")
    gain = jnp.sqrt(2.0)
    dims = [feat_dim] + [hidden_dim] * (num_layers - 1) + [output_dim]
    params = []
    for i in range(num_layers):
        fan_in, fan_out = dims[i], dims[i + 1]
        key, sub = jax.random.split(key)
        bound = gain * jnp.sqrt(6.0 / (fan_in + fan_out))
        # weight stored as (in, out) == transpose of PyTorch's (out, in)
        w = jax.random.uniform(
            sub, (fan_in, fan_out), dtype=jnp.float32, minval=-bound, maxval=bound
        )
        b = jnp.zeros((1, fan_out), dtype=jnp.float32)
        params.append((w, b))
    alpha = jnp.full((1, 1), 0.25, dtype=jnp.float32)
    return params, alpha


def mlp_reference(x, params, alpha):
    """Pure-JAX reference for correctness checking."""
    a = alpha[0, 0]
    n = len(params)
    for i, (w, b) in enumerate(params):
        x = x @ w + b
        if i < n - 1:
            x = jnp.where(x >= 0.0, x, a * x)
    return x


if __name__ == "__main__":
    key = jax.random.PRNGKey(0)
    batch, feat_dim, hidden_dim, num_layers, output_dim = 8, 32, 32, 3, 16

    k_params, k_x, k_x2 = jax.random.split(key, 3)
    params, alpha = init_mlp_params(
        k_params, feat_dim, hidden_dim, num_layers, output_dim
    )
    x = jax.random.normal(k_x, (batch, feat_dim), dtype=jnp.float32)

    # One-time parameter packing (hoisted out of the per-call forward path).
    prepared = prepare_mlp_params(params, alpha)                       # f32 MXU path
    prepared_bf16 = prepare_mlp_params(params, alpha, matmul_dtype=jnp.bfloat16)

    # jit so the (narrow) input pad / output slice fuse around the kernel.
    fwd = jax.jit(lambda xx: mlp_forward(xx, prepared))
    out = jax.block_until_ready(fwd(x))

    ref = mlp_reference(x, params, alpha)
    assert out.shape == (batch, output_dim)
    assert jnp.allclose(out, ref, atol=1e-5, rtol=1e-5)

    # Multi-tile path: batch >= 16 -> grid of 2 "parallel" steps (v7x megacore).
    x2 = jax.random.normal(k_x2, (48, feat_dim), dtype=jnp.float32)
    out2 = jax.block_until_ready(mlp_forward(x2, prepared))
    assert jnp.allclose(out2, mlp_reference(x2, params, alpha), atol=1e-5, rtol=1e-5)

    # bf16 MXU operands with f32 accumulation (v6e/v7x fast path, looser tol).
    out_bf16 = jax.block_until_ready(mlp_forward(x, prepared_bf16))
    assert jnp.allclose(out_bf16, ref, atol=0.1, rtol=0.1)

    print("KERNEL_OK")
</pallas_src>

<mosaic_0001>
module attributes {stable_mosaic.version = 11 : i64} {
  func.func @_mlp_kernel(%arg0: i32, %arg1: memref<1x1xf32, #tpu.memory_space<smem>>, %arg2: memref<8x128xf32, #tpu.memory_space<vmem>>, %arg3: memref<128x128xf32, #tpu.memory_space<vmem>>, %arg4: memref<1x128xf32, #tpu.memory_space<vmem>>, %arg5: memref<1x128x128xf32, #tpu.memory_space<vmem>>, %arg6: memref<1x1x128xf32, #tpu.memory_space<vmem>>, %arg7: memref<128x128xf32, #tpu.memory_space<vmem>>, %arg8: memref<1x128xf32, #tpu.memory_space<vmem>>, %arg9: memref<8x128xf32, #tpu.memory_space<vmem>>) attributes {dimension_semantics = [#tpu.dimension_semantics<parallel>], iteration_bounds = array<i64: 1>, scalar_prefetch = 0 : i64, scratch_operands = 0 : i64, tpu.core_type = #tpu.core_type<tc>, window_params = [{transform_indices = @transform_0, window_bounds = array<i64: 1, 1>}, {transform_indices = @transform_1, window_bounds = array<i64: 8, 128>}, {pipeline_mode = #tpu.pipeline_mode<synchronous>, transform_indices = @transform_2, window_bounds = array<i64: 128, 128>}, {pipeline_mode = #tpu.pipeline_mode<synchronous>, transform_indices = @transform_3, window_bounds = array<i64: 1, 128>}, {pipeline_mode = #tpu.pipeline_mode<synchronous>, transform_indices = @transform_4, window_bounds = array<i64: 1, 128, 128>}, {pipeline_mode = #tpu.pipeline_mode<synchronous>, transform_indices = @transform_5, window_bounds = array<i64: 1, 1, 128>}, {pipeline_mode = #tpu.pipeline_mode<synchronous>, transform_indices = @transform_6, window_bounds = array<i64: 128, 128>}, {pipeline_mode = #tpu.pipeline_mode<synchronous>, transform_indices = @transform_7, window_bounds = array<i64: 1, 128>}, {transform_indices = @transform_8, window_bounds = array<i64: 8, 128>}]} {
    %c0 = arith.constant 0 : index
    %c0_0 = arith.constant 0 : index
    %0 = memref.load %arg1[%c0, %c0_0] : memref<1x1xf32, #tpu.memory_space<smem>>
    %c0_1 = arith.constant 0 : index
    %c0_2 = arith.constant 0 : index
    %1 = vector.load %arg2[%c0_1, %c0_2] : memref<8x128xf32, #tpu.memory_space<vmem>>, vector<8x128xf32>
    %c0_3 = arith.constant 0 : index
    %c0_4 = arith.constant 0 : index
    %2 = vector.load %arg3[%c0_3, %c0_4] : memref<128x128xf32, #tpu.memory_space<vmem>>, vector<128x128xf32>
    %c0_5 = arith.constant 0 : index
    %c0_6 = arith.constant 0 : index
    %3 = vector.load %arg4[%c0_5, %c0_6] : memref<1x128xf32, #tpu.memory_space<vmem>>, vector<1x128xf32>
    %cst = arith.constant dense<0.000000e+00> : vector<8x128xf32>
    %4 = tpu.matmul %1, %2, %cst {dimension_numbers = #tpu.dot_dimension_numbers<[1], [0], [0], [1], [0, 0, 1, 1], [], []>} : vector<8x128xf32>, vector<128x128xf32>, vector<8x128xf32> -> vector<8x128xf32>
    %5 = vector.broadcast %3 : vector<1x128xf32> to vector<8x128xf32>
    %6 = arith.addf %4, %5 : vector<8x128xf32>
    %cst_7 = arith.constant 0.000000e+00 : f32
    %7 = vector.broadcast %cst_7 : f32 to vector<8x128xf32>
    %8 = arith.cmpf oge, %6, %7 : vector<8x128xf32>
    %9 = vector.broadcast %0 : f32 to vector<8x128xf32>
    %10 = arith.mulf %9, %6 : vector<8x128xf32>
    %11 = arith.select %8, %6, %10 : vector<8x128xi1>, vector<8x128xf32>
    %c0_8 = arith.constant 0 : index
    %c0_9 = arith.constant 0 : index
    %c0_10 = arith.constant 0 : index
    %12 = vector.load %arg5[%c0_8, %c0_9, %c0_10] : memref<1x128x128xf32, #tpu.memory_space<vmem>>, vector<1x128x128xf32>
    %13 = vector.shape_cast %12 : vector<1x128x128xf32> to vector<128x128xf32>
    %c0_11 = arith.constant 0 : index
    %c0_12 = arith.constant 0 : index
    %c0_13 = arith.constant 0 : index
    %14 = vector.load %arg6[%c0_11, %c0_12, %c0_13] : memref<1x1x128xf32, #tpu.memory_space<vmem>>, vector<1x1x128xf32>
    %15 = vector.shape_cast %14 : vector<1x1x128xf32> to vector<1x128xf32>
    %cst_14 = arith.constant dense<0.000000e+00> : vector<8x128xf32>
    %16 = tpu.matmul %11, %13, %cst_14 {dimension_numbers = #tpu.dot_dimension_numbers<[1], [0], [0], [1], [0, 0, 1, 1], [], []>} : vector<8x128xf32>, vector<128x128xf32>, vector<8x128xf32> -> vector<8x128xf32>
    %17 = vector.broadcast %15 : vector<1x128xf32> to vector<8x128xf32>
    %18 = arith.addf %16, %17 : vector<8x128xf32>
    %cst_15 = arith.constant 0.000000e+00 : f32
    %19 = vector.broadcast %cst_15 : f32 to vector<8x128xf32>
    %20 = arith.cmpf oge, %18, %19 : vector<8x128xf32>
    %21 = vector.broadcast %0 : f32 to vector<8x128xf32>
    %22 = arith.mulf %21, %18 : vector<8x128xf32>
    %23 = arith.select %20, %18, %22 : vector<8x128xi1>, vector<8x128xf32>
    %c0_16 = arith.constant 0 : index
    %c0_17 = arith.constant 0 : index
    %24 = vector.load %arg7[%c0_16, %c0_17] : memref<128x128xf32, #tpu.memory_space<vmem>>, vector<128x128xf32>
    %c0_18 = arith.constant 0 : index
    %c0_19 = arith.constant 0 : index
    %25 = vector.load %arg8[%c0_18, %c0_19] : memref<1x128xf32, #tpu.memory_space<vmem>>, vector<1x128xf32>
    %cst_20 = arith.constant dense<0.000000e+00> : vector<8x128xf32>
    %26 = tpu.matmul %23, %24, %cst_20 {dimension_numbers = #tpu.dot_dimension_numbers<[1], [0], [0], [1], [0, 0, 1, 1], [], []>} : vector<8x128xf32>, vector<128x128xf32>, vector<8x128xf32> -> vector<8x128xf32>
    %27 = vector.broadcast %25 : vector<1x128xf32> to vector<8x128xf32>
    %28 = arith.addf %26, %27 : vector<8x128xf32>
    %c0_21 = arith.constant 0 : index
    %c0_22 = arith.constant 0 : index
    %29 = vector.load %arg9[%c0_21, %c0_22] : memref<8x128xf32, #tpu.memory_space<vmem>>, vector<8x128xf32>
    tpu.vector_store %arg9[%c0_21, %c0_22], %28 {strides = array<i32>} : memref<8x128xf32, #tpu.memory_space<vmem>>, vector<8x128xf32>,
    return
  }
  func.func @transform_0(%arg0: i32) -> (i32, i32) {
    %c0_i32 = arith.constant 0 : i32
    %c0_i32_0 = arith.constant 0 : i32
    %c0_i32_1 = arith.constant 0 : i32
    return %c0_i32, %c0_i32_0 : i32, i32
  }
  func.func @transform_1(%arg0: i32) -> (i32, i32) {
    %c0_i32 = arith.constant 0 : i32
    %c0_i32_0 = arith.constant 0 : i32
    return %arg0, %c0_i32 : i32, i32
  }
  func.func @transform_2(%arg0: i32) -> (i32, i32) {
    %c0_i32 = arith.constant 0 : i32
    %c0_i32_0 = arith.constant 0 : i32
    %c0_i32_1 = arith.constant 0 : i32
    return %c0_i32, %c0_i32_0 : i32, i32
  }
  func.func @transform_3(%arg0: i32) -> (i32, i32) {
    %c0_i32 = arith.constant 0 : i32
    %c0_i32_0 = arith.constant 0 : i32
    %c0_i32_1 = arith.constant 0 : i32
    return %c0_i32, %c0_i32_0 : i32, i32
  }
  func.func @transform_4(%arg0: i32) -> (i32, i32, i32) {
    %c0_i32 = arith.constant 0 : i32
    %c0_i32_0 = arith.constant 0 : i32
    %c0_i32_1 = arith.constant 0 : i32
    %c0_i32_2 = arith.constant 0 : i32
    return %c0_i32, %c0_i32_0, %c0_i32_1 : i32, i32, i32
  }
  func.func @transform_5(%arg0: i32) -> (i32, i32, i32) {
    %c0_i32 = arith.constant 0 : i32
    %c0_i32_0 = arith.constant 0 : i32
    %c0_i32_1 = arith.constant 0 : i32
    %c0_i32_2 = arith.constant 0 : i32
    return %c0_i32, %c0_i32_0, %c0_i32_1 : i32, i32, i32
  }
  func.func @transform_6(%arg0: i32) -> (i32, i32) {
    %c0_i32 = arith.constant 0 : i32
    %c0_i32_0 = arith.constant 0 : i32
    %c0_i32_1 = arith.constant 0 : i32
    return %c0_i32, %c0_i32_0 : i32, i32
  }
  func.func @transform_7(%arg0: i32) -> (i32, i32) {
    %c0_i32 = arith.constant 0 : i32
    %c0_i32_0 = arith.constant 0 : i32
    %c0_i32_1 = arith.constant 0 : i32
    return %c0_i32, %c0_i32_0 : i32, i32
  }
  func.func @transform_8(%arg0: i32) -> (i32, i32) {
    %c0_i32 = arith.constant 0 : i32
    %c0_i32_0 = arith.constant 0 : i32
    return %arg0, %c0_i32 : i32, i32
  }
}

</mosaic_0001>

<llo_original>
// kernel: _lambda_.1
$region0: #{_lambda_.1}
  #allocation0 [shape = 'u32[]', space=smem, size = 0x4, offset = 0x4, fixed_abs, tag = 'smem constant byte address 0x4 - core index']
  #allocation1 [shape = 'u32[72,128]{1,0:T(1,128)}', space=vmem, size = 0x9000, scoped, tag = 'internal scratch']
  #allocation2 [shape = 'f32[1,1]{1,0:T(1,128)S(6)}', space=smem, size = 0x200, scoped, tag = 'scoped memory for _lambda_.1']
  %s0 = inlined_call_operand.<no memory space> [shape: f32[1,1], index: 0, kind: input, shape index: {}]
  %s1 = inlined_call_operand.vmem [shape: f32[8,128], index: 1, kind: input, shape index: {}]
  %s2 = inlined_call_operand.hbm [shape: f32[128,128], index: 2, kind: input, shape index: {}]
  %s3 = inlined_call_operand.vmem [shape: f32[1,128], index: 3, kind: input, shape index: {}, may-alias: {3,7}]
  %s4 = inlined_call_operand.hbm [shape: f32[1,128,128], index: 4, kind: input, shape index: {}]
  %s5 = inlined_call_operand.vmem [shape: f32[1,1,128], index: 5, kind: input, shape index: {}]
  %s6 = inlined_call_operand.hbm [shape: f32[128,128], index: 6, kind: input, shape index: {}]
  %s7 = inlined_call_operand.vmem [shape: f32[1,128], index: 7, kind: input, shape index: {}, may-alias: {3,7}]
  %s8 = inlined_call_operand.hbm [shape: f32[8,128], index: 8, kind: output, shape index: {}]
  %s9 = sld [smem:[#allocation0]]
  $region54: #{_lambda_.1} parent=0
    _
  %s11 = ssub.s32 1, %s9
  %s12 = scalar_select 0, %s11, %s9
  %13 = sst [smem:[#allocation2]] %s0
  $region1: #{_lambda_.1} parent=0
    #allocation3 [shape = 'u8[65536]{0}', space=vmem, size = 0x10000, scoped, tag = 'input window, operand 2, single buffered']
    #allocation4 [shape = 's32[1]{0}', space=sflag, size = 0x4, scoped, tag = 'scoped memory for _lambda_.1']
    #allocation5 [shape = 's32[1]{0}', space=sflag, size = 0x4, scoped, tag = 'scoped memory for _lambda_.1']
    #allocation6 [shape = 'u8[65536]{0}', space=vmem, size = 0x10000, scoped, tag = 'input window, operand 4, single buffered']
    #allocation7 [shape = 's32[1]{0}', space=sflag, size = 0x4, scoped, tag = 'scoped memory for _lambda_.1']
    #allocation8 [shape = 'u8[65536]{0}', space=vmem, size = 0x10000, scoped, tag = 'input window, operand 6, single buffered']
    #allocation9 [shape = 'u8[4096]{0}', space=vmem, size = 0x1000, scoped, tag = 'output window, operand 0, single buffered']
    %14 = vsyncpa [#allocation4], 0
    %15 = vsyncpa [#allocation7], 0
    %16 = vsyncpa [#allocation5], 0
    // Predicated region
    $region2: #{_lambda_.1} parent=1 // pred_check
      _
    $region3: #{_lambda_.1} parent=1 // pred_check_branch
      %18 = sbr.rel (0) target = $region5
    $region4: #{_lambda_.1} parent=1 // pred_region
      _
    $region5: #{_lambda_.1} parent=1 // pred_fallthru
      _
    // Predicated region
    $region6: #{_lambda_.1} parent=1 // pred_check
      _
    $region7: #{_lambda_.1} parent=1 // pred_check_branch
      %20 = sbr.rel (0) target = $region9
    $region8: #{_lambda_.1} parent=1 // pred_region
      _
    $region9: #{_lambda_.1} parent=1 // pred_fallthru
      _
    // Predicated region
    $region10: #{_lambda_.1} parent=1 // pred_check
      _
    $region11: #{_lambda_.1} parent=1 // pred_check_branch
      %22 = sbr.rel (0) target = $region13
    $region12: #{_lambda_.1} parent=1 // pred_region
      %24 = vsyncadd [#allocation4], 0
      %s25 = sshll.u32 %s2, 4
      %s26 = int_to_ptr.hbm [resolvable:$true] %s25
      %s27 = sshll.u32 [#allocation3], 4
      %s28 = int_to_ptr.vmem [resolvable:$true] %s27
      %33 = dma.hbm_to_vmem [thread:$0]  %s26, 2048, %s28, [#allocation4], 128, 128, 8
    $region13: #{_lambda_.1} parent=1 // pred_fallthru
      _
    // Predicated region
    $region14: #{_lambda_.1} parent=1 // pred_check
      _
    $region15: #{_lambda_.1} parent=1 // pred_check_branch
      %35 = sbr.rel (0) target = $region17
    $region16: #{_lambda_.1} parent=1 // pred_region
      _
    $region17: #{_lambda_.1} parent=1 // pred_fallthru
      _
    // Predicated region
    $region18: #{_lambda_.1} parent=1 // pred_check
      _
    $region19: #{_lambda_.1} parent=1 // pred_check_branch
      %37 = sbr.rel (0) target = $region21
    $region20: #{_lambda_.1} parent=1 // pred_region
      %39 = vsyncadd [#allocation7], 0
      %s40 = sshll.u32 %s4, 4
      %s41 = int_to_ptr.hbm [resolvable:$true] %s40
      %s42 = sshll.u32 [#allocation6], 4
      %s43 = int_to_ptr.vmem [resolvable:$true] %s42
      %48 = dma.hbm_to_vmem [thread:$0]  %s41, 2048, %s43, [#allocation7], 128, 128, 8
    $region21: #{_lambda_.1} parent=1 // pred_fallthru
      _
    // Predicated region
    $region22: #{_lambda_.1} parent=1 // pred_check
      _
    $region23: #{_lambda_.1} parent=1 // pred_check_branch
      %50 = sbr.rel (0) target = $region25
    $region24: #{_lambda_.1} parent=1 // pred_region
      _
    $region25: #{_lambda_.1} parent=1 // pred_fallthru
      _
    // Predicated region
    $region26: #{_lambda_.1} parent=1 // pred_check
      _
    $region27: #{_lambda_.1} parent=1 // pred_check_branch
      %52 = sbr.rel (0) target = $region29
    $region28: #{_lambda_.1} parent=1 // pred_region
      %54 = vsyncadd [#allocation7], 0
      %s55 = sshll.u32 %s6, 4
      %s56 = int_to_ptr.hbm [resolvable:$true] %s55
      %s57 = sshll.u32 [#allocation8], 4
      %s58 = int_to_ptr.vmem [resolvable:$true] %s57
      %63 = dma.hbm_to_vmem [thread:$0]  %s56, 2048, %s58, [#allocation7], 128, 128, 8
    $region29: #{_lambda_.1} parent=1 // pred_fallthru
      _
    // Predicated region
    $region30: #{_lambda_.1} parent=1 // pred_check
      _
    $region31: #{_lambda_.1} parent=1 // pred_check_branch
      %65 = sbr.rel (0) target = $region33
    $region32: #{_lambda_.1} parent=1 // pred_region
      _
    $region33: #{_lambda_.1} parent=1 // pred_fallthru
      _
    // Predicated region
    $region34: #{_lambda_.1} parent=1 // pred_check
      _
    $region35: #{_lambda_.1} parent=1 // pred_check_branch
      %67 = sbr.rel (0) target = $region37
    $region36: #{_lambda_.1} parent=1 // pred_region
      %69 = dma.done [#allocation4], 2048
    $region37: #{_lambda_.1} parent=1 // pred_fallthru
      _
    // Predicated region
    $region38: #{_lambda_.1} parent=1 // pred_check
      _
    $region39: #{_lambda_.1} parent=1 // pred_check_branch
      %71 = sbr.rel (0) target = $region41
    $region40: #{_lambda_.1} parent=1 // pred_region
      %73 = dma.done [#allocation7], 2048
    $region41: #{_lambda_.1} parent=1 // pred_fallthru
      _
    // Predicated region
    $region42: #{_lambda_.1} parent=1 // pred_check
      _
    $region43: #{_lambda_.1} parent=1 // pred_check_branch
      %75 = sbr.rel (0) target = $region45
    $region44: #{_lambda_.1} parent=1 // pred_region
      %77 = dma.done [#allocation7], 2048
    $region45: #{_lambda_.1} parent=1 // pred_fallthru
      _
    %s78 = sld [smem:[#allocation2]]
    %v79 = vld [vmem:[%s1] sm:$0xff]
    %v80 = vld [vmem:[#allocation3] sm:$0xff]
    %v81 = vld [vmem:[#allocation3 + $0x8] sm:$0xff]
    %v82 = vld [vmem:[#allocation3 + $0x10] sm:$0xff]
    %v83 = vld [vmem:[#allocation3 + $0x18] sm:$0xff]
    %v84 = vld [vmem:[#allocation3 + $0x20] sm:$0xff]
    %v85 = vld [vmem:[#allocation3 + $0x28] sm:$0xff]
    %v86 = vld [vmem:[#allocation3 + $0x30] sm:$0xff]
    %v87 = vld [vmem:[#allocation3 + $0x38] sm:$0xff]
    %v88 = vld [vmem:[#allocation3 + $0x40] sm:$0xff]
    %v89 = vld [vmem:[#allocation3 + $0x48] sm:$0xff]
    %v90 = vld [vmem:[#allocation3 + $0x50] sm:$0xff]
    %v91 = vld [vmem:[#allocation3 + $0x58] sm:$0xff]
    %v92 = vld [vmem:[#allocation3 + $0x60] sm:$0xff]
    %v93 = vld [vmem:[#allocation3 + $0x68] sm:$0xff]
    %v94 = vld [vmem:[#allocation3 + $0x70] sm:$0xff]
    %v95 = vld [vmem:[#allocation3 + $0x78] sm:$0xff]
    %v96 = vld [vmem:[%s3] sm:$0x1]
    %v98 = vperm.slane %v96, 0
    %100 = vmatpush.msra.mxu0 %v95
    %101 = vmatpush.msra.mxu0 %v94
    %102 = vmatpush.msra.mxu0 %v93
    %103 = vmatpush.msra.mxu0 %v92
    %104 = vmatpush.msra.mxu0 %v91
    %105 = vmatpush.msra.mxu0 %v90
    %106 = vmatpush.msra.mxu0 %v89
    %107 = vmatpush.msra.mxu0 %v88
    %108 = vmatpush.msra.mxu0 %v87
    %109 = vmatpush.msra.mxu0 %v86
    %110 = vmatpush.msra.mxu0 %v85
    %111 = vmatpush.msra.mxu0 %v84
    %112 = vmatpush.msra.mxu0 %v83
    %113 = vmatpush.msra.mxu0 %v82
    %114 = vmatpush.msra.mxu0 %v81
    %115 = vmatpush.msra.mxu0 %v80
    %116 = vmatmul.f32.gmra.mxu0 %v79
    %v117 = vpop.f32.mrf.mxu0
    %v118 = vadd.f32 %v98, %v117
    %119 = vdwg.mxu0
    %vm120 = vcmp.ge.f32.partialorder %v118, 0.0
    %v121 = vstv %s78
    %v122 = vmul.f32 %v121, %v118
    %v123 = vsel %vm120, %v118, %v122
    %v124 = vld [vmem:[#allocation6] sm:$0xff]
    %v125 = vld [vmem:[#allocation6 + $0x8] sm:$0xff]
    %v126 = vld [vmem:[#allocation6 + $0x10] sm:$0xff]
    %v127 = vld [vmem:[#allocation6 + $0x18] sm:$0xff]
    %v128 = vld [vmem:[#allocation6 + $0x20] sm:$0xff]
    %v129 = vld [vmem:[#allocation6 + $0x28] sm:$0xff]
    %v130 = vld [vmem:[#allocation6 + $0x30] sm:$0xff]
    %v131 = vld [vmem:[#allocation6 + $0x38] sm:$0xff]
    %v132 = vld [vmem:[#allocation6 + $0x40] sm:$0xff]
    %v133 = vld [vmem:[#allocation6 + $0x48] sm:$0xff]
    %v134 = vld [vmem:[#allocation6 + $0x50] sm:$0xff]
    %v135 = vld [vmem:[#allocation6 + $0x58] sm:$0xff]
    %v136 = vld [vmem:[#allocation6 + $0x60] sm:$0xff]
    %v137 = vld [vmem:[#allocation6 + $0x68] sm:$0xff]
    %v138 = vld [vmem:[#allocation6 + $0x70] sm:$0xff]
    %v139 = vld [vmem:[#allocation6 + $0x78] sm:$0xff]
    %v140 = vld [vmem:[%s5] sm:$0x1]
    %v142 = vperm.slane %v140, 0
    %144 = vmatpush.msra.mxu0 %v139
    %145 = vmatpush.msra.mxu0 %v138
    %146 = vmatpush.msra.mxu0 %v137
    %147 = vmatpush.msra.mxu0 %v136
    %148 = vmatpush.msra.mxu0 %v135
    %149 = vmatpush.msra.mxu0 %v134
    %150 = vmatpush.msra.mxu0 %v133
    %151 = vmatpush.msra.mxu0 %v132
    %152 = vmatpush.msra.mxu0 %v131
    %153 = vmatpush.msra.mxu0 %v130
    %154 = vmatpush.msra.mxu0 %v129
    %155 = vmatpush.msra.mxu0 %v128
    %156 = vmatpush.msra.mxu0 %v127
    %157 = vmatpush.msra.mxu0 %v126
    %158 = vmatpush.msra.mxu0 %v125
    %159 = vmatpush.msra.mxu0 %v124
    %160 = vmatmul.f32.gmra.mxu0 %v123
    %v161 = vpop.f32.mrf.mxu0
    %v162 = vadd.f32 %v142, %v161
    %163 = vdwg.mxu0
    %vm164 = vcmp.ge.f32.partialorder %v162, 0.0
    %v165 = vmul.f32 %v121, %v162
    %v166 = vsel %vm164, %v162, %v165
    %v167 = vld [vmem:[#allocation8] sm:$0xff]
    %v168 = vld [vmem:[#allocation8 + $0x8] sm:$0xff]
    %v169 = vld [vmem:[#allocation8 + $0x10] sm:$0xff]
    %v170 = vld [vmem:[#allocation8 + $0x18] sm:$0xff]
    %v171 = vld [vmem:[#allocation8 + $0x20] sm:$0xff]
    %v172 = vld [vmem:[#allocation8 + $0x28] sm:$0xff]
    %v173 = vld [vmem:[#allocation8 + $0x30] sm:$0xff]
    %v174 = vld [vmem:[#allocation8 + $0x38] sm:$0xff]
    %v175 = vld [vmem:[#allocation8 + $0x40] sm:$0xff]
    %v176 = vld [vmem:[#allocation8 + $0x48] sm:$0xff]
    %v177 = vld [vmem:[#allocation8 + $0x50] sm:$0xff]
    %v178 = vld [vmem:[#allocation8 + $0x58] sm:$0xff]
    %v179 = vld [vmem:[#allocation8 + $0x60] sm:$0xff]
    %v180 = vld [vmem:[#allocation8 + $0x68] sm:$0xff]
    %v181 = vld [vmem:[#allocation8 + $0x70] sm:$0xff]
    %v182 = vld [vmem:[#allocation8 + $0x78] sm:$0xff]
    %v183 = vld [vmem:[%s7] sm:$0x1]
    %v185 = vperm.slane %v183, 0
    %187 = vmatpush.msra.mxu0 %v182
    %188 = vmatpush.msra.mxu0 %v181
    %189 = vmatpush.msra.mxu0 %v180
    %190 = vmatpush.msra.mxu0 %v179
    %191 = vmatpush.msra.mxu0 %v178
    %192 = vmatpush.msra.mxu0 %v177
    %193 = vmatpush.msra.mxu0 %v176
    %194 = vmatpush.msra.mxu0 %v175
    %195 = vmatpush.msra.mxu0 %v174
    %196 = vmatpush.msra.mxu0 %v173
    %197 = vmatpush.msra.mxu0 %v172
    %198 = vmatpush.msra.mxu0 %v171
    %199 = vmatpush.msra.mxu0 %v170
    %200 = vmatpush.msra.mxu0 %v169
    %201 = vmatpush.msra.mxu0 %v168
    %202 = vmatpush.msra.mxu0 %v167
    %203 = vmatmul.f32.gmra.mxu0 %v166
    %v204 = vpop.f32.mrf.mxu0
    %v205 = vadd.f32 %v185, %v204
    %206 = vdwg.mxu0
    %207 = vst [vmem:[#allocation9] sm:$0xff] %v205
    // Predicated region
    $region46: #{_lambda_.1} parent=1 // pred_check
      _
    $region47: #{_lambda_.1} parent=1 // pred_check_branch
      %209 = sbr.rel (0) target = $region49
    $region48: #{_lambda_.1} parent=1 // pred_region
      %211 = vsyncadd [#allocation5], 0
      %s213 = sshll.u32 [#allocation9], 4
      %s214 = int_to_ptr.vmem [resolvable:$true] %s213
      %s215 = sshll.u32 %s8, 4
      %s216 = int_to_ptr.hbm [resolvable:$true] %s215
      %218 = dma.vmem_to_hbm [thread:$0]  %s214, 128, %s216, [#allocation5]
    $region49: #{_lambda_.1} parent=1 // pred_fallthru
      _
    // Predicated region
    $region50: #{_lambda_.1} parent=1 // pred_check
      _
    $region51: #{_lambda_.1} parent=1 // pred_check_branch
      %220 = sbr.rel (0) target = $region53
    $region52: #{_lambda_.1} parent=1 // pred_region
      %222 = dma.done [#allocation5], 128
    $region53: #{_lambda_.1} parent=1 // pred_fallthru
      _
    %223 = vsyncpa [#allocation4], 1
    %224 = vsyncpa [#allocation7], 1
    %225 = vsyncpa [#allocation5], 1

</llo_original>
